<compile_context>
chip_gen: v7x
topology: tpu7x:2x2x1
jax: 0.10.0
libtpu: 0.0.40
codegen_flags: <defaults>
</compile_context>

<pallas_src>
import jax
import jax.numpy as jnp
from jax.experimental import pallas as pl
from jax.experimental.pallas import tpu as pltpu


def _round_up(n, m):
    return ((n + m - 1) // m) * m


_WEIGHT_TILE_BUDGET = 8 * 1024 * 1024   # bytes for the double-buffered weight tile
_MAX_SINGLE_K = 2048                    # above this, tile the contraction axis


def _pick_tiles(feat_dim, n_pad, itemsize):
    """Choose (tk, k_pad, tn): contraction tile, padded K, output-feature tile."""
    if feat_dim <= _MAX_SINGLE_K:
        tk, k_pad = feat_dim, feat_dim          # single K step, no K padding
    else:
        tk = 512
        k_pad = _round_up(feat_dim, tk)
    tn = 128
    for cand in (512, 256, 128):
        if n_pad % cand == 0 and 2 * tk * cand * itemsize <= _WEIGHT_TILE_BUDGET:
            tn = cand
            break
    return tk, k_pad, tn


def _fused_matmul_kernel(x_ref, w_ref, y_ref, acc_ref):
    """One (B_pad, tk) x (tk, tn) MXU matmul per step; f32 accumulation over K."""
    @pl.when(pl.program_id(1) == 0)
    def _():
        acc_ref[...] = jnp.zeros_like(acc_ref)

    acc_ref[...] += jnp.dot(
        x_ref[...], w_ref[...], preferred_element_type=jnp.float32
    )

    @pl.when(pl.program_id(1) == pl.num_programs(1) - 1)
    def _():
        y_ref[...] = acc_ref[...].astype(y_ref.dtype)


def classifier_multihead(x, w1, w2, w3):
    """x: (B, F); w1: (C, F); w2, w3: (F, F)  -- PyTorch (out, in) weight layout.

    Returns (y1, y2, y3) = (x @ w1.T, x @ w2.T, x @ w3.T), matching the PyTorch
    module's forward (x.detach() is a forward no-op).
    """
    B, F = x.shape
    C = w1.shape[0]
    dtype = x.dtype
    itemsize = jnp.dtype(dtype).itemsize

    # Per-head lane padding -> lane-dense stores + 128-aligned unpack offsets.
    C_pad = _round_up(C, 128)
    F_out_pad = _round_up(F, 128)
    N_pad = C_pad + 2 * F_out_pad

    tk, K_pad, tn = _pick_tiles(F, N_pad, itemsize)
    B_pad = _round_up(max(B, 8), 8)

    # One-time weight prep: transpose to (in, out), zero-pad, fuse.  Zero pads
    # keep the math exact; padded rows/cols are sliced away after the kernel.
    def prep(w, out_pad):
        wt = w.T.astype(dtype)                                  # (F, out)
        return jnp.pad(wt, ((0, K_pad - F), (0, out_pad - w.shape[0])))

    w_fused = jnp.concatenate(
        [prep(w1, C_pad), prep(w2, F_out_pad), prep(w3, F_out_pad)], axis=1
    )  # (K_pad, N_pad)

    x_p = jnp.pad(x, ((0, B_pad - B), (0, K_pad - F)))          # (B_pad, K_pad)

    grid = (N_pad // tn, K_pad // tk)
    flops = 2 * B_pad * K_pad * N_pad
    bytes_accessed = (B_pad * K_pad + K_pad * N_pad + B_pad * N_pad) * itemsize

    y_packed = pl.pallas_call(
        _fused_matmul_kernel,
        out_shape=jax.ShapeDtypeStruct((B_pad, N_pad), dtype),
        grid=grid,
        in_specs=[
            # LHS block index only depends on k -> stays resident across the
            # whole "parallel" N axis (no re-DMA of x per output tile).
            pl.BlockSpec((B_pad, tk), lambda j, k: (0, k)),
            # Fused weight tile: lane-dense, streamed once.
            pl.BlockSpec((tk, tn), lambda j, k: (k, j)),
        ],
        out_specs=pl.BlockSpec((B_pad, tn), lambda j, k: (0, j)),
        scratch_shapes=[pltpu.VMEM((B_pad, tn), jnp.float32)],
        compiler_params=pltpu.CompilerParams(
            dimension_semantics=("parallel", "arbitrary"),
        ),
        cost_estimate=pl.CostEstimate(
            flops=flops, transcendentals=0, bytes_accessed=bytes_accessed
        ),
    )(x_p, w_fused)

    # Unpack heads: each slice starts at a 128-aligned column offset.
    y1 = y_packed[:B, :C]
    y2 = y_packed[:B, C_pad : C_pad + F]
    y3 = y_packed[:B, C_pad + F_out_pad : C_pad + F_out_pad + F]
    return y1, y2, y3


def init_linear_weight(key, out_features, in_features, dtype=jnp.float32):
    """PyTorch nn.Linear default init: U(-1/sqrt(fan_in), 1/sqrt(fan_in))."""
    bound = 1.0 / (in_features ** 0.5)
    return jax.random.uniform(
        key, (out_features, in_features), dtype=dtype, minval=-bound, maxval=bound
    )


if __name__ == "__main__":
    feat_dim = 32
    num_classes = 16
    batch = 8

    key = jax.random.PRNGKey(0)
    kx, k1, k2, k3 = jax.random.split(key, 4)

    x = jax.random.normal(kx, (batch, feat_dim), dtype=jnp.float32)

    # PyTorch Linear weights in (out, in) layout, exactly like the nn.Module.
    w1 = init_linear_weight(k1, num_classes, feat_dim)   # fc1
    w2 = init_linear_weight(k2, feat_dim, feat_dim)      # fc2
    w3 = init_linear_weight(k3, feat_dim, feat_dim)      # fc3

    y1, y2, y3 = classifier_multihead(x, w1, w2, w3)
    jax.block_until_ready((y1, y2, y3))

    # Reference check against plain JAX (mirrors the PyTorch forward).
    r1 = x @ w1.T
    r2 = x @ w2.T
    r3 = x @ w3.T
    assert y1.shape == (batch, num_classes)
    assert y2.shape == (batch, feat_dim)
    assert y3.shape == (batch, feat_dim)
    assert jnp.allclose(y1, r1, atol=1e-5)
    assert jnp.allclose(y2, r2, atol=1e-5)
    assert jnp.allclose(y3, r3, atol=1e-5)

    print("KERNEL_OK")
</pallas_src>

<mosaic_0001>
module attributes {stable_mosaic.version = 11 : i64} {
  func.func @_fused_matmul_kernel(%arg0: i32, %arg1: i32, %arg2: memref<8x32xf32, #tpu.memory_space<vmem>>, %arg3: memref<32x128xf32, #tpu.memory_space<vmem>>, %arg4: memref<8x128xf32, #tpu.memory_space<vmem>>, %arg5: memref<8x128xf32, #tpu.memory_space<vmem>>) attributes {dimension_semantics = [#tpu.dimension_semantics<parallel>, #tpu.dimension_semantics<arbitrary>], iteration_bounds = array<i64: 3, 1>, scalar_prefetch = 0 : i64, scratch_operands = 1 : i64, tpu.core_type = #tpu.core_type<tc>, window_params = [{transform_indices = @transform_0, window_bounds = array<i64: 8, 32>}, {transform_indices = @transform_1, window_bounds = array<i64: 32, 128>}, {transform_indices = @transform_2, window_bounds = array<i64: 8, 128>}]} {
    %c0_i32 = arith.constant 0 : i32
    %0 = arith.cmpi eq, %arg1, %c0_i32 : i32
    %1 = arith.extui %0 : i1 to i32
    %c0_i32_0 = arith.constant 0 : i32
    %2 = arith.cmpi ne, %1, %c0_i32_0 : i32
    scf.if %2 {
      %cst_10 = arith.constant 0.000000e+00 : f32
      %12 = vector.broadcast %cst_10 : f32 to vector<8x128xf32>
      %c0_11 = arith.constant 0 : index
      %c0_12 = arith.constant 0 : index
      %13 = vector.load %arg5[%c0_11, %c0_12] : memref<8x128xf32, #tpu.memory_space<vmem>>, vector<8x128xf32>
      tpu.vector_store %arg5[%c0_11, %c0_12], %12 {strides = array<i32>} : memref<8x128xf32, #tpu.memory_space<vmem>>, vector<8x128xf32>,
    } else {
    }
    %c0 = arith.constant 0 : index
    %c0_1 = arith.constant 0 : index
    %3 = vector.load %arg5[%c0, %c0_1] : memref<8x128xf32, #tpu.memory_space<vmem>>, vector<8x128xf32>
    %c0_2 = arith.constant 0 : index
    %c0_3 = arith.constant 0 : index
    %4 = vector.load %arg2[%c0_2, %c0_3] : memref<8x32xf32, #tpu.memory_space<vmem>>, vector<8x32xf32>
    %c0_4 = arith.constant 0 : index
    %c0_5 = arith.constant 0 : index
    %5 = vector.load %arg3[%c0_4, %c0_5] : memref<32x128xf32, #tpu.memory_space<vmem>>, vector<32x128xf32>
    %cst = arith.constant dense<0.000000e+00> : vector<8x128xf32>
    %6 = tpu.matmul %4, %5, %cst {dimension_numbers = #tpu.dot_dimension_numbers<[1], [0], [0], [1], [0, 0, 1, 1], [], []>} : vector<8x32xf32>, vector<32x128xf32>, vector<8x128xf32> -> vector<8x128xf32>
    %7 = arith.addf %3, %6 : vector<8x128xf32>
    %c0_6 = arith.constant 0 : index
    %c0_7 = arith.constant 0 : index
    %8 = vector.load %arg5[%c0_6, %c0_7] : memref<8x128xf32, #tpu.memory_space<vmem>>, vector<8x128xf32>
    tpu.vector_store %arg5[%c0_6, %c0_7], %7 {strides = array<i32>} : memref<8x128xf32, #tpu.memory_space<vmem>>, vector<8x128xf32>,
    %c0_i32_8 = arith.constant 0 : i32
    %9 = arith.cmpi eq, %arg1, %c0_i32_8 : i32
    %10 = arith.extui %9 : i1 to i32
    %c0_i32_9 = arith.constant 0 : i32
    %11 = arith.cmpi ne, %10, %c0_i32_9 : i32
    scf.if %11 {
      %c0_10 = arith.constant 0 : index
      %c0_11 = arith.constant 0 : index
      %12 = vector.load %arg5[%c0_10, %c0_11] : memref<8x128xf32, #tpu.memory_space<vmem>>, vector<8x128xf32>
      %c0_12 = arith.constant 0 : index
      %c0_13 = arith.constant 0 : index
      %13 = vector.load %arg4[%c0_12, %c0_13] : memref<8x128xf32, #tpu.memory_space<vmem>>, vector<8x128xf32>
      tpu.vector_store %arg4[%c0_12, %c0_13], %12 {strides = array<i32>} : memref<8x128xf32, #tpu.memory_space<vmem>>, vector<8x128xf32>,
    } else {
    }
    return
  }
  func.func @transform_0(%arg0: i32, %arg1: i32) -> (i32, i32) {
    %c0_i32 = arith.constant 0 : i32
    %c0_i32_0 = arith.constant 0 : i32
    return %c0_i32, %arg1 : i32, i32
  }
  func.func @transform_1(%arg0: i32, %arg1: i32) -> (i32, i32) {
    %c0_i32 = arith.constant 0 : i32
    return %arg1, %arg0 : i32, i32
  }
  func.func @transform_2(%arg0: i32, %arg1: i32) -> (i32, i32) {
    %c0_i32 = arith.constant 0 : i32
    %c0_i32_0 = arith.constant 0 : i32
    return %c0_i32, %arg0 : i32, i32
  }
}

</mosaic_0001>

<llo_original>
// kernel: tpu_custom_call.1
$region0: #{tpu_custom_call.1}
  #allocation0 [shape = 'u32[]', space=smem, size = 0x4, offset = 0x4, fixed_abs, tag = 'smem constant byte address 0x4 - core index']
  #allocation1 [shape = 'u32[144,128]{1,0:T(1,128)}', space=vmem, size = 0x12000, scoped, tag = 'internal scratch']
  #allocation2 [shape = 'f32[8,128]{1,0:T(8,128)}', space=vmem, size = 0x1000, scoped, tag = 'scratch operand']
  %s0 = inlined_call_operand.hbm [shape: f32[8,32], index: 0, kind: input, shape index: {}]
  %s1 = inlined_call_operand.hbm [shape: f32[32,384], index: 1, kind: input, shape index: {}]
  %s2 = inlined_call_operand.hbm [shape: f32[8,384], index: 2, kind: output, shape index: {}]
  %s3 = sld [smem:[#allocation0]]
  $region57: #{tpu_custom_call.1} parent=0
    _
  %s5 = ssub.s32 1, %s3
  %s6 = scalar_select 0, %s5, %s3
  $region1: #{tpu_custom_call.1} parent=0
    #allocation3 [shape = 'u8[4096]{0}', space=vmem, size = 0x1000, scoped, tag = 'input window, operand 0, single buffered']
    #allocation4 [shape = 's32[2]{0}', space=sflag, size = 0x8, scoped, tag = 'scoped memory for tpu_custom_call.1']
    #allocation5 [shape = 's32[2]{0}', space=sflag, size = 0x8, scoped, tag = 'scoped memory for tpu_custom_call.1']
    #allocation6 [shape = 'u8[32768]{0}', space=vmem, size = 0x8000, scoped, tag = 'input window, operand 1']
    #allocation7 [shape = 's32[2]{0}', space=sflag, size = 0x8, scoped, tag = 'scoped memory for tpu_custom_call.1']
    #allocation8 [shape = 'u8[8192]{0}', space=vmem, size = 0x2000, scoped, tag = 'output window, operand 0']
    %7 = vsyncpa [#allocation4], 0
    %8 = vsyncpa [#allocation7], 0
    %s9 = scalar_lea.sflag [#allocation7], 1
    %10 = vsyncpa %s9, 0
    %11 = vsyncpa [#allocation5], 0
    %s12 = scalar_lea.sflag [#allocation5], 1
    %13 = vsyncpa %s12, 0
    loop: start=0, step=1, limit=5
    $region2: #{tpu_custom_call.1} parent=1 // loop_pre_header
      _
    $region3: #{tpu_custom_call.1} parent=1 // loop_header
      %s15 = sphi 0, %s19
      %p16 = scmp.ge.s32.totalorder %s15, 5
      %s22 = sphi 0, %s34
      %s23 = sphi 0, %s30
      %s24 = sphi 0, %s22
      %s25 = sphi 0, %s23
      %s26 = sphi 0, %s24
      %s27 = sphi 0, %s25
      %s37 = sphi 0, %s39
      %s40 = sphi 0, %s37
      %s41 = sphi 0, %s40
      %s57 = sphi 0, %s41
      %s65 = sphi 0, %s67
      %s68 = sphi 0, %s65
      %s69 = sphi 0, %s68
      %s85 = sphi 0, %s69
      %s91 = sphi 0, %s93
      %s94 = sphi 0, %s91
      %s95 = sphi 0, %s94
      %s111 = sphi 0, %s95
    $region4: #{tpu_custom_call.1} parent=1 // loop_header_branch
      %18 = sbr.rel (%p16) target = $region8
    $region5: #{tpu_custom_call.1} parent=1 // loop_body
      %s20 = ssub.s32 %s15, 1
      %s21 = ssub.s32 %s15, 2
      %s28 = sadd.s32 1, %s23
      %p29 = scmp.ge.s32.totalorder %s28, 1
      %s30 = scalar_select %p29, 0, %s28
      %s31 = sadd.s32 1, %s22
      %s32 = scalar_select %p29, %s31, %s22
      %p33 = scmp.ge.s32.totalorder %s32, 3
      %s34 = scalar_select %p33, 0, %s32
      %s35 = ssub.s32 %s23, %s30
      %p36 = scmp.eq.s32.totalorder %s35, 0
      %s38 = sadd.s32 %s37, 1
      %s39 = scalar_select %p36, %s37, %s38
      %p42 = pneg %p36
      %p43 = scmp.eq.s32.totalorder %s15, 2
      %p44 = por %p42, %p43
      %p45 = scmp.ne.s32.totalorder %s37, %s40
      %p46 = scmp.eq.s32.totalorder %s15, 0
      %p47 = por %p45, %p46
      %p48 = scmp.ne.s32.totalorder %s37, %s40
      %p49 = scmp.eq.s32.totalorder %s20, 2
      %p50 = por %p48, %p49
      %p51 = scmp.ne.s32.totalorder %s40, %s41
      %p52 = scmp.eq.s32.totalorder %s20, 0
      %p53 = por %p51, %p52
      %p54 = scmp.ne.s32.totalorder %s40, %s41
      %p55 = scmp.eq.s32.totalorder %s21, 2
      %p56 = por %p54, %p55
      %p58 = scmp.ne.s32.totalorder %s41, %s57
      %p59 = scmp.eq.s32.totalorder %s21, 0
      %p60 = por %p58, %p59
      %s61 = ssub.s32 %s23, %s30
      %s62 = ssub.s32 %s22, %s34
      %s63 = sor.u32 %s61, %s62
      %p64 = scmp.eq.s32.totalorder %s63, 0
      %s66 = sadd.s32 %s65, 1
      %s67 = scalar_select %p64, %s65, %s66
      %p70 = pneg %p64
      %p71 = scmp.eq.s32.totalorder %s15, 2
      %p72 = por %p70, %p71
      %p73 = scmp.ne.s32.totalorder %s65, %s68
      %p74 = scmp.eq.s32.totalorder %s15, 0
      %p75 = por %p73, %p74
      %p76 = scmp.ne.s32.totalorder %s65, %s68
      %p77 = scmp.eq.s32.totalorder %s20, 2
      %p78 = por %p76, %p77
      %p79 = scmp.ne.s32.totalorder %s68, %s69
      %p80 = scmp.eq.s32.totalorder %s20, 0
      %p81 = por %p79, %p80
      %p82 = scmp.ne.s32.totalorder %s68, %s69
      %p83 = scmp.eq.s32.totalorder %s21, 2
      %p84 = por %p82, %p83
      %p86 = scmp.ne.s32.totalorder %s69, %s85
      %p87 = scmp.eq.s32.totalorder %s21, 0
      %p88 = por %p86, %p87
      %s89 = ssub.s32 %s22, %s34
      %p90 = scmp.eq.s32.totalorder %s89, 0
      %s92 = sadd.s32 %s91, 1
      %s93 = scalar_select %p90, %s91, %s92
      %p96 = pneg %p90
      %p97 = scmp.eq.s32.totalorder %s15, 2
      %p98 = por %p96, %p97
      %p99 = scmp.ne.s32.totalorder %s91, %s94
      %p100 = scmp.eq.s32.totalorder %s15, 0
      %p101 = por %p99, %p100
      %p102 = scmp.ne.s32.totalorder %s91, %s94
      %p103 = scmp.eq.s32.totalorder %s20, 2
      %p104 = por %p102, %p103
      %p105 = scmp.ne.s32.totalorder %s94, %s95
      %p106 = scmp.eq.s32.totalorder %s20, 0
      %p107 = por %p105, %p106
      %p108 = scmp.ne.s32.totalorder %s94, %s95
      %p109 = scmp.eq.s32.totalorder %s21, 2
      %p110 = por %p108, %p109
      %p112 = scmp.ne.s32.totalorder %s95, %s111
      %p113 = scmp.eq.s32.totalorder %s21, 0
      %p114 = por %p112, %p113
      %p115 = scmp.le.s32.totalorder 1, %s15
      %p116 = scmp.lt.s32.totalorder %s15, 4
      %p117 = pnand %p115, %p116
      %p118 = pneg %p117
      // Predicated region
      $region9: #{tpu_custom_call.1} parent=5 // pred_check
        _
      $region10: #{tpu_custom_call.1} parent=5 // pred_check_branch
        %120 = sbr.rel (%p117) target = $region12
      $region11: #{tpu_custom_call.1} parent=5 // pred_region
        %s121 = ssub.s32 %s15, 1
        // Predicated region
        $region13: #{tpu_custom_call.1} parent=11 // pred_check
          %p122 = pneg %p53
        $region14: #{tpu_custom_call.1} parent=11 // pred_check_branch
          %124 = sbr.rel (%p122) target = $region16
        $region15: #{tpu_custom_call.1} parent=11 // pred_region
          %s126 = ssub.s32 128, 128
          %127 = vsyncadd [#allocation4], %s126
          %s128 = smul.addr %s25, 128
          %s129 = scalar_lea.hbm %s0, %s128
          %s131 = sshll.u32 [#allocation3], 4
          %s132 = int_to_ptr.vmem [resolvable:$true] %s131
          %134 = dma.hbm_to_vmem [thread:$0]  %s129, 128, %s132, [#allocation4]
        $region16: #{tpu_custom_call.1} parent=11 // pred_fallthru
          _
      $region12: #{tpu_custom_call.1} parent=5 // pred_fallthru
        _
      %p135 = scmp.lt.s32.totalorder %s15, 3
      // Predicated region
      $region17: #{tpu_custom_call.1} parent=5 // pred_check
        %p136 = pneg %p135
      $region18: #{tpu_custom_call.1} parent=5 // pred_check_branch
        %138 = sbr.rel (%p136) target = $region20
      $region19: #{tpu_custom_call.1} parent=5 // pred_region
        // Predicated region
        $region21: #{tpu_custom_call.1} parent=19 // pred_check
          %p139 = pneg %p75
        $region22: #{tpu_custom_call.1} parent=19 // pred_check_branch
          %141 = sbr.rel (%p139) target = $region24
        $region23: #{tpu_custom_call.1} parent=19 // pred_region
          %s142 = sand.u32 %s65, 1
          %s143 = scalar_lea.sflag [#allocation7], %s142
          %s144 = sand.u32 %s65, 1
          %s145 = smul.addr %s144, 32
          %s146 = scalar_lea.vmem [#allocation6], %s145
          %s147 = smul.u32 4, %s23
          %s149 = ssub.s32 512, 512
          %150 = vsyncadd %s143, %s149
          %s151 = smul.addr %s147, 3
          %s152 = sadd.s32 %s22, %s151
          %s153 = smul.addr %s152, 128
          %s154 = scalar_lea.hbm %s1, %s153
          %s155 = sshll.u32 %s146, 4
          %s156 = int_to_ptr.vmem [resolvable:$true] %s155
          %161 = dma.hbm_to_vmem [thread:$0]  %s154, 512, %s156, %s143, 384, 128, 8
        $region24: #{tpu_custom_call.1} parent=19 // pred_fallthru
          _
      $region20: #{tpu_custom_call.1} parent=5 // pred_fallthru
        _
      %p162 = scmp.le.s32.totalorder 1, %s15
      %p163 = scmp.lt.s32.totalorder %s15, 4
      %p164 = pnand %p162, %p163
      %p165 = pneg %p164
      // Predicated region
      $region25: #{tpu_custom_call.1} parent=5 // pred_check
        _
      $region26: #{tpu_custom_call.1} parent=5 // pred_check_branch
        %167 = sbr.rel (%p164) target = $region28
      $region27: #{tpu_custom_call.1} parent=5 // pred_region
        %s168 = ssub.s32 %s15, 1
        // Predicated region
        $region29: #{tpu_custom_call.1} parent=27 // pred_check
          %p169 = pneg %p53
        $region30: #{tpu_custom_call.1} parent=27 // pred_check_branch
          %171 = sbr.rel (%p169) target = $region32
        $region31: #{tpu_custom_call.1} parent=27 // pred_region
          %172 = dma.done [#allocation4], 128
        $region32: #{tpu_custom_call.1} parent=27 // pred_fallthru
          _
        %s173 = sand.u32 %s68, 1
        %s174 = scalar_lea.sflag [#allocation7], %s173
        %s175 = sand.u32 %s68, 1
        %s176 = smul.addr %s175, 32
        %s177 = scalar_lea.vmem [#allocation6], %s176
        // Predicated region
        $region33: #{tpu_custom_call.1} parent=27 // pred_check
          %p178 = pneg %p81
        $region34: #{tpu_custom_call.1} parent=27 // pred_check_branch
          %180 = sbr.rel (%p178) target = $region36
        $region35: #{tpu_custom_call.1} parent=27 // pred_region
          %181 = dma.done %s174, 512
        $region36: #{tpu_custom_call.1} parent=27 // pred_fallthru
          _
        %p182 = pneg %p53
        %p183 = pneg %p50
        %s184 = sand.u32 %s68, 1
        %s185 = scalar_lea.sflag [#allocation7], %s184
        %s186 = sand.u32 %s68, 1
        %s187 = smul.addr %s186, 32
        %s188 = scalar_lea.vmem [#allocation6], %s187
        %p189 = pneg %p81
        %p190 = pneg %p78
        %p191 = pneg %p107
        %p192 = pneg %p104
        %s193 = sand.u32 %s94, 1
        %s194 = scalar_lea.sflag [#allocation5], %s193
        %s195 = sand.u32 %s94, 1
        %s196 = smul.addr %s195, 8
        %s197 = scalar_lea.vmem [#allocation8], %s196
        %s198 = smul.u32 4, %s25
        %p199 = scmp.eq.s32.totalorder %s25, 0
        // Predicated region
        $region37: #{tpu_custom_call.1} parent=27 // pred_check
          %p200 = pneg %p199
        $region38: #{tpu_custom_call.1} parent=27 // pred_check_branch
          %202 = sbr.rel (%p200) target = $region40
        $region39: #{tpu_custom_call.1} parent=27 // pred_region
          %203 = vst [vmem:[#allocation2] sm:$0xff] 0.0
        $region40: #{tpu_custom_call.1} parent=27 // pred_fallthru
          _
        %v204 = vld [vmem:[#allocation2] sm:$0xff]
        %v205 = vld [vmem:[#allocation3] sm:$0xff]
        %v206 = vld [vmem:[%s177] sm:$0xff]
        %v207 = vld [vmem:[%s177 + $0x8] sm:$0xff]
        %v208 = vld [vmem:[%s177 + $0x10] sm:$0xff]
        %v209 = vld [vmem:[%s177 + $0x18] sm:$0xff]
        %vm210 = vcmask 261120
        %v212 = vsel %vm210, %v205, 0
        %214 = vmatprep.subr.mxu0 0.0
        %215 = vmatpush1.msra.mxu0 %v206
        %216 = vmatprep.subr.mxu0 0.0
        %217 = vmatpush1.msra.mxu0 %v207
        %218 = vmatprep.subr.mxu0 0.0
        %219 = vmatpush1.msra.mxu0 %v208
        %220 = vmatprep.subr.mxu0 0.0
        %221 = vmatpush1.msra.mxu0 %v209
        %222 = vmatprep.subr.mxu0 0.0
        %223 = vmatpush1.msra.mxu0 0.0
        %224 = vmatprep.subr.mxu0 0.0
        %225 = vmatpush1.msra.mxu0 0.0
        %226 = vmatprep.subr.mxu0 0.0
        %227 = vmatpush1.msra.mxu0 0.0
        %228 = vmatprep.subr.mxu0 0.0
        %229 = vmatpush1.msra.mxu0 0.0
        %230 = vmatprep.subr.mxu0 0.0
        %231 = vmatpush1.msra.mxu0 0.0
        %232 = vmatprep.subr.mxu0 0.0
        %233 = vmatpush1.msra.mxu0 0.0
        %234 = vmatprep.subr.mxu0 0.0
        %235 = vmatpush1.msra.mxu0 0.0
        %236 = vmatprep.subr.mxu0 0.0
        %237 = vmatpush1.msra.mxu0 0.0
        %238 = vmatprep.subr.mxu0 0.0
        %239 = vmatpush1.msra.mxu0 0.0
        %240 = vmatprep.subr.mxu0 0.0
        %241 = vmatpush1.msra.mxu0 0.0
        %242 = vmatprep.subr.mxu0 0.0
        %243 = vmatpush1.msra.mxu0 0.0
        %244 = vmatprep.subr.mxu0 0.0
        %245 = vmatpush1.msra.mxu0 0.0
        %246 = vmatprep.subr.mxu0 0.0
        %247 = vmatpush1.msra.mxu0 0.0
        %248 = vmatprep.subr.mxu0 0.0
        %249 = vmatpush1.msra.mxu0 0.0
        %250 = vmatprep.subr.mxu0 0.0
        %251 = vmatpush1.msra.mxu0 0.0
        %252 = vmatprep.subr.mxu0 0.0
        %253 = vmatpush1.msra.mxu0 0.0
        %254 = vmatprep.subr.mxu0 0.0
        %255 = vmatpush1.msra.mxu0 0.0
        %256 = vmatprep.subr.mxu0 0.0
        %257 = vmatpush1.msra.mxu0 0.0
        %258 = vmatprep.subr.mxu0 0.0
        %259 = vmatpush1.msra.mxu0 0.0
        %260 = vmatprep.subr.mxu0 0.0
        %261 = vmatpush1.msra.mxu0 0.0
        %262 = vmatprep.subr.mxu0 0.0
        %263 = vmatpush1.msra.mxu0 0.0
        %264 = vmatprep.subr.mxu0 0.0
        %265 = vmatpush1.msra.mxu0 0.0
        %266 = vmatprep.subr.mxu0 0.0
        %267 = vmatpush1.msra.mxu0 0.0
        %268 = vmatprep.subr.mxu0 0.0
        %269 = vmatpush1.msra.mxu0 0.0
        %270 = vmatprep.subr.mxu0 0.0
        %271 = vmatpush1.msra.mxu0 0.0
        %272 = vmatprep.subr.mxu0 0.0
        %273 = vmatpush1.msra.mxu0 0.0
        %274 = vmatprep.subr.mxu0 0.0
        %275 = vmatpush1.msra.mxu0 0.0
        %276 = vmatprep.subr.mxu0 0.0
        %277 = vmatpush1.msra.mxu0 0.0
        %278 = vmatprep.mubr.f32.mxu0 0.0
        %279 = vmatmul.mubr.f32.gmra.mrb[0].mxu0 %v212
        %v280 = vpop.f32.mrb[0].mxu0
        %v281 = vadd.f32 0.0, %v280
        %v282 = vpop.f32.mrb[0].mxu0
        %283 = vdwg.mxu0
        %v284 = vadd.f32 %v204, %v281
        %285 = vst [vmem:[#allocation2] sm:$0xff] %v284
        // Predicated region
        $region41: #{tpu_custom_call.1} parent=27 // pred_check
          %p286 = pneg %p199
        $region42: #{tpu_custom_call.1} parent=27 // pred_check_branch
          %288 = sbr.rel (%p286) target = $region44
        $region43: #{tpu_custom_call.1} parent=27 // pred_region
          %v289 = vld [vmem:[#allocation2] sm:$0xff]
          %290 = vst [vmem:[%s197] sm:$0xff] %v289
        $region44: #{tpu_custom_call.1} parent=27 // pred_fallthru
          _
        %s291 = sand.u32 %s94, 1
        %s292 = scalar_lea.sflag [#allocation5], %s291
        %s293 = sand.u32 %s94, 1
        %s294 = smul.addr %s293, 8
        %s295 = scalar_lea.vmem [#allocation8], %s294
        // Predicated region
        $region45: #{tpu_custom_call.1} parent=27 // pred_check
          %p296 = pneg %p104
        $region46: #{tpu_custom_call.1} parent=27 // pred_check_branch
          %298 = sbr.rel (%p296) target = $region48
        $region47: #{tpu_custom_call.1} parent=27 // pred_region
          %s300 = ssub.s32 128, 128
          %301 = vsyncadd %s292, %s300
          %s302 = smul.addr %s24, 128
          %s303 = scalar_lea.hbm %s2, %s302
          %s305 = sshll.u32 %s295, 4
          %s306 = int_to_ptr.vmem [resolvable:$true] %s305
          %308 = dma.vmem_to_hbm [thread:$0]  %s306, 128, %s303, %s292
        $region48: #{tpu_custom_call.1} parent=27 // pred_fallthru
          _
      $region28: #{tpu_custom_call.1} parent=5 // pred_fallthru
        _
      %p309 = scmp.le.s32.totalorder 2, %s15
      // Predicated region
      $region49: #{tpu_custom_call.1} parent=5 // pred_check
        %p310 = pneg %p309
      $region50: #{tpu_custom_call.1} parent=5 // pred_check_branch
        %312 = sbr.rel (%p310) target = $region52
      $region51: #{tpu_custom_call.1} parent=5 // pred_region
        %s313 = ssub.s32 %s15, 2
        // Predicated region
        $region53: #{tpu_custom_call.1} parent=51 // pred_check
          %p314 = pneg %p110
        $region54: #{tpu_custom_call.1} parent=51 // pred_check_branch
          %316 = sbr.rel (%p314) target = $region56
        $region55: #{tpu_custom_call.1} parent=51 // pred_region
          %s317 = sand.u32 %s95, 1
          %s318 = scalar_lea.sflag [#allocation5], %s317
          %s319 = sand.u32 %s95, 1
          %s320 = smul.addr %s319, 8
          %s321 = scalar_lea.vmem [#allocation8], %s320
          %322 = dma.done %s318, 128
        $region56: #{tpu_custom_call.1} parent=51 // pred_fallthru
          _
      $region52: #{tpu_custom_call.1} parent=5 // pred_fallthru
        _
    $region6: #{tpu_custom_call.1} parent=1 // loop_footer
      %s19 = sadd.s32 1, %s15
    $region7: #{tpu_custom_call.1} parent=1 // loop_footer_branch
      %14 = sbr.rel target = $region3
    $region8: #{tpu_custom_call.1} parent=1 // loop_exit
      _
    %323 = vsyncpa [#allocation4], 1
    %s324 = scalar_lea.sflag [#allocation4], 1
    %325 = vsyncpa %s324, 1
    %326 = vsyncpa [#allocation7], 1
    %s327 = scalar_lea.sflag [#allocation7], 1
    %328 = vsyncpa %s327, 1
    %329 = vsyncpa [#allocation5], 1
    %s330 = scalar_lea.sflag [#allocation5], 1
    %331 = vsyncpa %s330, 1

</llo_original>
